<compile_context>
chip_gen: v5e
topology: v5e:2x2
jax: 0.10.0
libtpu: 0.0.40
codegen_flags: <defaults>
</compile_context>

<pallas_src>
from functools import partial

import numpy as np
import jax
import jax.numpy as jnp
from jax import lax
from jax.experimental import pallas as pl
from jax.experimental.pallas import tpu as pltpu

IN_CHANNELS = 3
OUT_CHANNELS = 16
KERNEL_SIZE = 3


def _fused_kernel(x_ref, w_ref, b_ref, o_ref):
    """x_ref: (TN, Ci*H*W) f32; w_ref: (Ci*H*W, Co) f32 (pool scale pre-folded);
    b_ref: (1, Co) f32 (conv bias + extra bias pre-combined); o_ref: (TN, 1) f32."""
    # conv-transpose + global-average-pool collapsed into one MXU contraction
    vals = jnp.dot(x_ref[...], w_ref[...],
                   preferred_element_type=jnp.float32) + b_ref[...]        # (TN, Co)
    # numerically stable logsumexp over channels (exp/log land on the EUP)
    m = jnp.max(vals, axis=1, keepdims=True)                               # (TN, 1)
    lse = m + jnp.log(jnp.sum(jnp.exp(vals - m), axis=1, keepdims=True))   # (TN, 1)
    # sum over the 1x1 spatial dims is a no-op; * 10; single store
    o_ref[...] = lse * 10.0


@partial(jax.jit, static_argnames=("tn",))
def model_forward(x, weight, conv_bias, extra_bias, *, tn=1024):
    """x: (N, C_in, H, W); weight: (C_in, C_out, K, K) (PyTorch ConvTranspose2d
    layout); conv_bias: (C_out,); extra_bias: (C_out, 1, 1).  Returns (N, 1)."""
    N, Ci, H, W = x.shape
    Co = weight.shape[1]
    K = weight.shape[2]
    Ho, Wo = H + K - 1, W + K - 1
    inv_p = 1.0 / float(Ho * Wo)          # mean over the ConvTranspose output grid
    chw = Ci * H * W

    # ---- tiny glue (pure JAX, no HBM copy of x) ----
    if x.dtype != jnp.float32:
        x = x.astype(jnp.float32)
    x2d = x.reshape(N, chw)                                                # free reshape

    # kernel-window-summed ConvTranspose weights (sum is flip-invariant), pooling
    # scale folded in, repeated over the H*W positions so the spatial reduction
    # rides the MXU contraction.  Only ~Ci*HW*Co*4 B (~48 KiB) and resident once.
    w_sum = jnp.sum(weight.astype(jnp.float32), axis=(2, 3)) * inv_p       # (Ci, Co)
    w_big = jnp.repeat(w_sum, H * W, axis=0)                               # (Ci*HW, Co)

    # both biases act uniformly after pooling -> fold into one (1, Co) operand
    b_comb = (conv_bias.reshape(1, Co) +
              extra_bias.reshape(1, Co)).astype(jnp.float32)               # (1, Co)

    # batch tile: full array if small, else a large multiple-of-8 tile (TN<=1024
    # keeps double-buffered f32 tiles at ~6 MiB -> fits v7x/v6e/v5e comfortably)
    tn_eff = N if N <= tn else tn
    grid = (pl.cdiv(N, tn_eff),)

    vmem_need = (2 * 4 * (tn_eff * chw + tn_eff)     # double-buffered x + out tiles
                 + 2 * 4 * (chw * Co + Co)           # resident weights + bias
                 + (2 << 20))                        # slack
    vmem_limit = int(min(max(vmem_need, 8 << 20), 32 << 20))

    out = pl.pallas_call(
        _fused_kernel,
        grid=grid,
        in_specs=[
            pl.BlockSpec((tn_eff, chw), lambda i: (i, 0)),   # x tile, pipelined
            pl.BlockSpec((chw, Co), lambda i: (0, 0)),       # weights, resident
            pl.BlockSpec((1, Co), lambda i: (0, 0)),         # combined bias, resident
        ],
        out_specs=pl.BlockSpec((tn_eff, 1), lambda i: (i, 0)),
        out_shape=jax.ShapeDtypeStruct((N, 1), jnp.float32),
        compiler_params=pltpu.CompilerParams(
            dimension_semantics=("parallel",),               # shard batch across TCs
            vmem_limit_bytes=vmem_limit),
        cost_estimate=pl.CostEstimate(
            flops=int(2 * N * chw * Co + 8 * N * Co),
            transcendentals=int(N * (Co + 1)),
            bytes_accessed=int(4 * (N * chw + chw * Co + Co + N))),
    )(x2d, w_big, b_comb)
    return out


@jax.jit
def reference_forward(x, weight, conv_bias, extra_bias):
    """Pure-JAX reference using XLA's convolution (independent code path)."""
    K = weight.shape[2]
    w_oihw = jnp.transpose(weight[:, :, ::-1, ::-1], (1, 0, 2, 3))         # (Co,Ci,K,K)
    conv = lax.conv_general_dilated(
        x, w_oihw, window_strides=(1, 1),
        padding=[(K - 1, K - 1), (K - 1, K - 1)],
        dimension_numbers=("NCHW", "OIHW", "NCHW"))
    conv = conv + conv_bias.reshape(1, -1, 1, 1)
    m = jnp.mean(conv, axis=(2, 3), keepdims=True)                         # (N,Co,1,1)
    m = m + extra_bias.reshape(1, -1, 1, 1)
    lse = jax.scipy.special.logsumexp(m, axis=1, keepdims=True)            # (N,1,1,1)
    s = jnp.sum(lse, axis=(2, 3))                                          # (N,1)
    return s * 10.0


if __name__ == "__main__":
    key = jax.random.PRNGKey(0)
    k1, k2, k3, k4, k5 = jax.random.split(key, 5)

    N, H, W = 2, 16, 16
    x = jax.random.normal(k1, (N, IN_CHANNELS, H, W), jnp.float32)

    # Deterministic synthetic parameters (shapes from nn.ConvTranspose2d(3, 16, 3)
    # and the extra bias Parameter of shape (16, 1, 1)).
    fan = IN_CHANNELS * KERNEL_SIZE * KERNEL_SIZE
    scale = 1.0 / float(np.sqrt(fan))
    weight = jax.random.uniform(
        k2, (IN_CHANNELS, OUT_CHANNELS, KERNEL_SIZE, KERNEL_SIZE),
        jnp.float32, minval=-scale, maxval=scale)
    conv_bias = jax.random.uniform(
        k3, (OUT_CHANNELS,), jnp.float32, minval=-scale, maxval=scale)
    extra_bias = jax.random.normal(k4, (OUT_CHANNELS, 1, 1), jnp.float32)

    # --- small-shape correctness (single block, full-array batch tile) ---
    out = jax.block_until_ready(model_forward(x, weight, conv_bias, extra_bias))
    ref = jax.block_until_ready(reference_forward(x, weight, conv_bias, extra_bias))
    assert out.shape == (N, 1) and out.dtype == jnp.float32
    np.testing.assert_allclose(np.asarray(out), np.asarray(ref), rtol=1e-4, atol=1e-4)

    # --- exercise the multi-block grid + ragged tail path with a tiny tile ---
    N2 = 20
    x2 = jax.random.normal(k5, (N2, IN_CHANNELS, H, W), jnp.float32)
    out2 = jax.block_until_ready(model_forward(x2, weight, conv_bias, extra_bias, tn=8))
    ref2 = jax.block_until_ready(reference_forward(x2, weight, conv_bias, extra_bias))
    assert out2.shape == (N2, 1)
    np.testing.assert_allclose(np.asarray(out2), np.asarray(ref2), rtol=1e-4, atol=1e-4)

    print("KERNEL_OK")
</pallas_src>

<mosaic_0001>
module attributes {stable_mosaic.version = 11 : i64} {
  func.func @_fused_kernel(%arg0: i32, %arg1: memref<2x768xf32, #tpu.memory_space<vmem>>, %arg2: memref<768x16xf32, #tpu.memory_space<vmem>>, %arg3: memref<1x16xf32, #tpu.memory_space<vmem>>, %arg4: memref<2x1xf32, #tpu.memory_space<vmem>>) attributes {dimension_semantics = [#tpu.dimension_semantics<parallel>], iteration_bounds = array<i64: 1>, scalar_prefetch = 0 : i64, scratch_operands = 0 : i64, tpu.core_type = #tpu.core_type<tc>, window_params = [{transform_indices = @transform_0, window_bounds = array<i64: 2, 768>}, {pipeline_mode = #tpu.pipeline_mode<synchronous>, transform_indices = @transform_1, window_bounds = array<i64: 768, 16>}, {pipeline_mode = #tpu.pipeline_mode<synchronous>, transform_indices = @transform_2, window_bounds = array<i64: 1, 16>}, {transform_indices = @transform_3, window_bounds = array<i64: 2, 1>}]} {
    %c0 = arith.constant 0 : index
    %c0_0 = arith.constant 0 : index
    %0 = vector.load %arg1[%c0, %c0_0] : memref<2x768xf32, #tpu.memory_space<vmem>>, vector<2x768xf32>
    %c0_1 = arith.constant 0 : index
    %c0_2 = arith.constant 0 : index
    %1 = vector.load %arg2[%c0_1, %c0_2] : memref<768x16xf32, #tpu.memory_space<vmem>>, vector<768x16xf32>
    %cst = arith.constant dense<0.000000e+00> : vector<2x16xf32>
    %2 = tpu.matmul %0, %1, %cst {dimension_numbers = #tpu.dot_dimension_numbers<[1], [0], [0], [1], [0, 0, 1, 1], [], []>} : vector<2x768xf32>, vector<768x16xf32>, vector<2x16xf32> -> vector<2x16xf32>
    %c0_3 = arith.constant 0 : index
    %c0_4 = arith.constant 0 : index
    %3 = vector.load %arg3[%c0_3, %c0_4] : memref<1x16xf32, #tpu.memory_space<vmem>>, vector<1x16xf32>
    %4 = vector.broadcast %3 : vector<1x16xf32> to vector<2x16xf32>
    %5 = arith.addf %2, %4 : vector<2x16xf32>
    %cst_5 = arith.constant dense<0xFF800000> : vector<2xf32>
    %6 = vector.multi_reduction <maximumf>, %5, %cst_5 [1] : vector<2x16xf32> to vector<2xf32>
    %7 = vector.shape_cast %6 : vector<2xf32> to vector<2x1xf32>
    %8 = vector.broadcast %7 : vector<2x1xf32> to vector<2x16xf32>
    %9 = arith.subf %5, %8 : vector<2x16xf32>
    %10 = math.exp %9 : vector<2x16xf32>
    %cst_6 = arith.constant dense<0.000000e+00> : vector<2xf32>
    %11 = vector.multi_reduction <add>, %10, %cst_6 [1] : vector<2x16xf32> to vector<2xf32>
    %12 = vector.shape_cast %11 : vector<2xf32> to vector<2x1xf32>
    %13 = math.log %12 : vector<2x1xf32>
    %14 = arith.addf %7, %13 : vector<2x1xf32>
    %cst_7 = arith.constant 1.000000e+01 : f32
    %15 = vector.broadcast %cst_7 : f32 to vector<2x1xf32>
    %16 = arith.mulf %14, %15 : vector<2x1xf32>
    %c0_8 = arith.constant 0 : index
    %c0_9 = arith.constant 0 : index
    %17 = vector.load %arg4[%c0_8, %c0_9] : memref<2x1xf32, #tpu.memory_space<vmem>>, vector<2x1xf32>
    tpu.vector_store %arg4[%c0_8, %c0_9], %16 {strides = array<i32>} : memref<2x1xf32, #tpu.memory_space<vmem>>, vector<2x1xf32>,
    return
  }
  func.func @transform_0(%arg0: i32) -> (i32, i32) {
    %c0_i32 = arith.constant 0 : i32
    %c0_i32_0 = arith.constant 0 : i32
    return %arg0, %c0_i32 : i32, i32
  }
  func.func @transform_1(%arg0: i32) -> (i32, i32) {
    %c0_i32 = arith.constant 0 : i32
    %c0_i32_0 = arith.constant 0 : i32
    %c0_i32_1 = arith.constant 0 : i32
    return %c0_i32, %c0_i32_0 : i32, i32
  }
  func.func @transform_2(%arg0: i32) -> (i32, i32) {
    %c0_i32 = arith.constant 0 : i32
    %c0_i32_0 = arith.constant 0 : i32
    %c0_i32_1 = arith.constant 0 : i32
    return %c0_i32, %c0_i32_0 : i32, i32
  }
  func.func @transform_3(%arg0: i32) -> (i32, i32) {
    %c0_i32 = arith.constant 0 : i32
    %c0_i32_0 = arith.constant 0 : i32
    return %arg0, %c0_i32 : i32, i32
  }
}

</mosaic_0001>

<llo_original>
// kernel: model_forward.1
$region0: #{model_forward.1}
  #allocation0 [shape = 'u32[]', space=smem, size = 0x4, offset = 0x4, fixed_abs, tag = 'smem constant byte address 0x4 - core index']
  #allocation1 [shape = 'u32[72,128]{1,0:T(1,128)}', space=vmem, size = 0x9000, scoped, tag = 'internal scratch']
  %s0 = inlined_call_operand.vmem [shape: f32[2,768], index: 0, kind: input, shape index: {}]
  %s1 = inlined_call_operand.vmem [shape: f32[768,16], index: 1, kind: input, shape index: {}]
  %s2 = inlined_call_operand.vmem [shape: f32[1,16], index: 2, kind: input, shape index: {}]
  %s3 = inlined_call_operand.vmem [shape: f32[2,1], index: 3, kind: output, shape index: {}]
  %s4 = sld [smem:[#allocation0]]
  $region22: #{model_forward.1} parent=0
    _
  %s6 = ssub.s32 1, %s4
  %s7 = scalar_select 0, %s6, %s4
  // Predicated region
  $region2: #{model_forward.1} parent=0 // pred_check
    _
  $region3: #{model_forward.1} parent=0 // pred_check_branch
    %9 = sbr.rel (0) target = $region5
  $region4: #{model_forward.1} parent=0 // pred_region
    _
  $region5: #{model_forward.1} parent=0 // pred_fallthru
    _
  // Predicated region
  $region6: #{model_forward.1} parent=0 // pred_check
    _
  $region7: #{model_forward.1} parent=0 // pred_check_branch
    %11 = sbr.rel (0) target = $region9
  $region8: #{model_forward.1} parent=0 // pred_region
    _
  $region9: #{model_forward.1} parent=0 // pred_fallthru
    _
  // Predicated region
  $region10: #{model_forward.1} parent=0 // pred_check
    _
  $region11: #{model_forward.1} parent=0 // pred_check_branch
    %13 = sbr.rel (0) target = $region13
  $region12: #{model_forward.1} parent=0 // pred_region
    _
  $region13: #{model_forward.1} parent=0 // pred_fallthru
    _
  %v14 = vld [vmem:[%s0] sm:$0xff]
  %v15 = vld [vmem:[%s0 + $0x8] sm:$0xf]
  %v16 = vld [vmem:[%s1] sm:$0xff]
  %v17 = vld [vmem:[%s1 + $0x8] sm:$0xff]
  %v18 = vld [vmem:[%s1 + $0x10] sm:$0xff]
  %v19 = vld [vmem:[%s1 + $0x18] sm:$0xff]
  %v20 = vld [vmem:[%s1 + $0x20] sm:$0xff]
  %v21 = vld [vmem:[%s1 + $0x28] sm:$0xff]
  %v22 = vld [vmem:[%s1 + $0x30] sm:$0xff]
  %v23 = vld [vmem:[%s1 + $0x38] sm:$0xff]
  %v24 = vld [vmem:[%s1 + $0x40] sm:$0xff]
  %v25 = vld [vmem:[%s1 + $0x48] sm:$0xff]
  %v26 = vld [vmem:[%s1 + $0x50] sm:$0xff]
  %v27 = vld [vmem:[%s1 + $0x58] sm:$0xff]
  %v28 = vld [vmem:[%s1 + $0x60] sm:$0xff]
  %v29 = vld [vmem:[%s1 + $0x68] sm:$0xff]
  %v30 = vld [vmem:[%s1 + $0x70] sm:$0xff]
  %v31 = vld [vmem:[%s1 + $0x78] sm:$0xff]
  %v32 = vld [vmem:[%s1 + $0x80] sm:$0xff]
  %v33 = vld [vmem:[%s1 + $0x88] sm:$0xff]
  %v34 = vld [vmem:[%s1 + $0x90] sm:$0xff]
  %v35 = vld [vmem:[%s1 + $0x98] sm:$0xff]
  %v36 = vld [vmem:[%s1 + $0xa0] sm:$0xff]
  %v37 = vld [vmem:[%s1 + $0xa8] sm:$0xff]
  %v38 = vld [vmem:[%s1 + $0xb0] sm:$0xff]
  %v39 = vld [vmem:[%s1 + $0xb8] sm:$0xff]
  %v40 = vld [vmem:[%s1 + $0xc0] sm:$0xff]
  %v41 = vld [vmem:[%s1 + $0xc8] sm:$0xff]
  %v42 = vld [vmem:[%s1 + $0xd0] sm:$0xff]
  %v43 = vld [vmem:[%s1 + $0xd8] sm:$0xff]
  %v44 = vld [vmem:[%s1 + $0xe0] sm:$0xff]
  %v45 = vld [vmem:[%s1 + $0xe8] sm:$0xff]
  %v46 = vld [vmem:[%s1 + $0xf0] sm:$0xff]
  %v47 = vld [vmem:[%s1 + $0xf8] sm:$0xff]
  %v48 = vld [vmem:[%s1 + $0x100] sm:$0xff]
  %v49 = vld [vmem:[%s1 + $0x108] sm:$0xff]
  %v50 = vld [vmem:[%s1 + $0x110] sm:$0xff]
  %v51 = vld [vmem:[%s1 + $0x118] sm:$0xff]
  %v52 = vld [vmem:[%s1 + $0x120] sm:$0xff]
  %v53 = vld [vmem:[%s1 + $0x128] sm:$0xff]
  %v54 = vld [vmem:[%s1 + $0x130] sm:$0xff]
  %v55 = vld [vmem:[%s1 + $0x138] sm:$0xff]
  %v56 = vld [vmem:[%s1 + $0x140] sm:$0xff]
  %v57 = vld [vmem:[%s1 + $0x148] sm:$0xff]
  %v58 = vld [vmem:[%s1 + $0x150] sm:$0xff]
  %v59 = vld [vmem:[%s1 + $0x158] sm:$0xff]
  %v60 = vld [vmem:[%s1 + $0x160] sm:$0xff]
  %v61 = vld [vmem:[%s1 + $0x168] sm:$0xff]
  %v62 = vld [vmem:[%s1 + $0x170] sm:$0xff]
  %v63 = vld [vmem:[%s1 + $0x178] sm:$0xff]
  %v64 = vld [vmem:[%s1 + $0x180] sm:$0xff]
  %v65 = vld [vmem:[%s1 + $0x188] sm:$0xff]
  %v66 = vld [vmem:[%s1 + $0x190] sm:$0xff]
  %v67 = vld [vmem:[%s1 + $0x198] sm:$0xff]
  %v68 = vld [vmem:[%s1 + $0x1a0] sm:$0xff]
  %v69 = vld [vmem:[%s1 + $0x1a8] sm:$0xff]
  %v70 = vld [vmem:[%s1 + $0x1b0] sm:$0xff]
  %v71 = vld [vmem:[%s1 + $0x1b8] sm:$0xff]
  %v72 = vld [vmem:[%s1 + $0x1c0] sm:$0xff]
  %v73 = vld [vmem:[%s1 + $0x1c8] sm:$0xff]
  %v74 = vld [vmem:[%s1 + $0x1d0] sm:$0xff]
  %v75 = vld [vmem:[%s1 + $0x1d8] sm:$0xff]
  %v76 = vld [vmem:[%s1 + $0x1e0] sm:$0xff]
  %v77 = vld [vmem:[%s1 + $0x1e8] sm:$0xff]
  %v78 = vld [vmem:[%s1 + $0x1f0] sm:$0xff]
  %v79 = vld [vmem:[%s1 + $0x1f8] sm:$0xff]
  %v80 = vld [vmem:[%s1 + $0x200] sm:$0xff]
  %v81 = vld [vmem:[%s1 + $0x208] sm:$0xff]
  %v82 = vld [vmem:[%s1 + $0x210] sm:$0xff]
  %v83 = vld [vmem:[%s1 + $0x218] sm:$0xff]
  %v84 = vld [vmem:[%s1 + $0x220] sm:$0xff]
  %v85 = vld [vmem:[%s1 + $0x228] sm:$0xff]
  %v86 = vld [vmem:[%s1 + $0x230] sm:$0xff]
  %v87 = vld [vmem:[%s1 + $0x238] sm:$0xff]
  %v88 = vld [vmem:[%s1 + $0x240] sm:$0xff]
  %v89 = vld [vmem:[%s1 + $0x248] sm:$0xff]
  %v90 = vld [vmem:[%s1 + $0x250] sm:$0xff]
  %v91 = vld [vmem:[%s1 + $0x258] sm:$0xff]
  %v92 = vld [vmem:[%s1 + $0x260] sm:$0xff]
  %v93 = vld [vmem:[%s1 + $0x268] sm:$0xff]
  %v94 = vld [vmem:[%s1 + $0x270] sm:$0xff]
  %v95 = vld [vmem:[%s1 + $0x278] sm:$0xff]
  %v96 = vld [vmem:[%s1 + $0x280] sm:$0xff]
  %v97 = vld [vmem:[%s1 + $0x288] sm:$0xff]
  %v98 = vld [vmem:[%s1 + $0x290] sm:$0xff]
  %v99 = vld [vmem:[%s1 + $0x298] sm:$0xff]
  %v100 = vld [vmem:[%s1 + $0x2a0] sm:$0xff]
  %v101 = vld [vmem:[%s1 + $0x2a8] sm:$0xff]
  %v102 = vld [vmem:[%s1 + $0x2b0] sm:$0xff]
  %v103 = vld [vmem:[%s1 + $0x2b8] sm:$0xff]
  %v104 = vld [vmem:[%s1 + $0x2c0] sm:$0xff]
  %v105 = vld [vmem:[%s1 + $0x2c8] sm:$0xff]
  %v106 = vld [vmem:[%s1 + $0x2d0] sm:$0xff]
  %v107 = vld [vmem:[%s1 + $0x2d8] sm:$0xff]
  %v108 = vld [vmem:[%s1 + $0x2e0] sm:$0xff]
  %v109 = vld [vmem:[%s1 + $0x2e8] sm:$0xff]
  %v110 = vld [vmem:[%s1 + $0x2f0] sm:$0xff]
  %v111 = vld [vmem:[%s1 + $0x2f8] sm:$0xff]
  %v112 = vld [vmem:[%s2] sm:$0x1]
  %v114 = vperm.slane %v112, 0
  %118 = vst [vmem:[#allocation1] ss:$4 sm:$0xff] %v14
  %s119 = scalar_lea.vmem [#allocation1], 32
  %120 = vst [vmem:[%s119] ss:$4 sm:$0xff] %v15
  %v121 = vld.sshfl [vmem:[#allocation1] sm:$0xff pattern:$0x73625140]
  %v122 = vld.sshfl [vmem:[#allocation1 + $0x8] sm:$0xff pattern:$0x73625140]
  %v123 = vld.sshfl [vmem:[#allocation1 + $0x10] sm:$0xff pattern:$0x73625140]
  %v124 = vld.sshfl [vmem:[#allocation1 + $0x18] sm:$0xff pattern:$0x73625140]
  %v125 = vld.sshfl [vmem:[#allocation1 + $0x20] sm:$0xff pattern:$0x73625140]
  %v126 = vld.sshfl [vmem:[#allocation1 + $0x28] sm:$0xff pattern:$0x73625140]
  %133 = vmatpush.msra.mxu0 %v31
  %134 = vmatpush.msra.mxu0 %v30
  %135 = vmatpush.msra.mxu0 %v29
  %136 = vmatpush.msra.mxu0 %v28
  %137 = vmatpush.msra.mxu0 %v27
  %138 = vmatpush.msra.mxu0 %v26
  %139 = vmatpush.msra.mxu0 %v25
  %140 = vmatpush.msra.mxu0 %v24
  %141 = vmatpush.msra.mxu0 %v23
  %142 = vmatpush.msra.mxu0 %v22
  %143 = vmatpush.msra.mxu0 %v21
  %144 = vmatpush.msra.mxu0 %v20
  %145 = vmatpush.msra.mxu0 %v19
  %146 = vmatpush.msra.mxu0 %v18
  %147 = vmatpush.msra.mxu0 %v17
  %148 = vmatpush.msra.mxu0 %v16
  %149 = vmatmul.f32.gmra.mxu0 %v121
  %v150 = vpop.f32.mrf.mxu0
  %v151 = vadd.f32 %v114, %v150
  %152 = vdwg.mxu0
  %153 = vmatpush.msra.mxu0 %v47
  %154 = vmatpush.msra.mxu0 %v46
  %155 = vmatpush.msra.mxu0 %v45
  %156 = vmatpush.msra.mxu0 %v44
  %157 = vmatpush.msra.mxu0 %v43
  %158 = vmatpush.msra.mxu0 %v42
  %159 = vmatpush.msra.mxu0 %v41
  %160 = vmatpush.msra.mxu0 %v40
  %161 = vmatpush.msra.mxu0 %v39
  %162 = vmatpush.msra.mxu0 %v38
  %163 = vmatpush.msra.mxu0 %v37
  %164 = vmatpush.msra.mxu0 %v36
  %165 = vmatpush.msra.mxu0 %v35
  %166 = vmatpush.msra.mxu0 %v34
  %167 = vmatpush.msra.mxu0 %v33
  %168 = vmatpush.msra.mxu0 %v32
  %169 = vmatmul.f32.gmra.mxu0 %v122
  %v170 = vpop.f32.mrf.mxu0
  %v171 = vadd.f32 %v151, %v170
  %172 = vdwg.mxu0
  %173 = vmatpush.msra.mxu0 %v63
  %174 = vmatpush.msra.mxu0 %v62
  %175 = vmatpush.msra.mxu0 %v61
  %176 = vmatpush.msra.mxu0 %v60
  %177 = vmatpush.msra.mxu0 %v59
  %178 = vmatpush.msra.mxu0 %v58
  %179 = vmatpush.msra.mxu0 %v57
  %180 = vmatpush.msra.mxu0 %v56
  %181 = vmatpush.msra.mxu0 %v55
  %182 = vmatpush.msra.mxu0 %v54
  %183 = vmatpush.msra.mxu0 %v53
  %184 = vmatpush.msra.mxu0 %v52
  %185 = vmatpush.msra.mxu0 %v51
  %186 = vmatpush.msra.mxu0 %v50
  %187 = vmatpush.msra.mxu0 %v49
  %188 = vmatpush.msra.mxu0 %v48
  %189 = vmatmul.f32.gmra.mxu0 %v123
  %v190 = vpop.f32.mrf.mxu0
  %v191 = vadd.f32 %v171, %v190
  %192 = vdwg.mxu0
  %193 = vmatpush.msra.mxu0 %v79
  %194 = vmatpush.msra.mxu0 %v78
  %195 = vmatpush.msra.mxu0 %v77
  %196 = vmatpush.msra.mxu0 %v76
  %197 = vmatpush.msra.mxu0 %v75
  %198 = vmatpush.msra.mxu0 %v74
  %199 = vmatpush.msra.mxu0 %v73
  %200 = vmatpush.msra.mxu0 %v72
  %201 = vmatpush.msra.mxu0 %v71
  %202 = vmatpush.msra.mxu0 %v70
  %203 = vmatpush.msra.mxu0 %v69
  %204 = vmatpush.msra.mxu0 %v68
  %205 = vmatpush.msra.mxu0 %v67
  %206 = vmatpush.msra.mxu0 %v66
  %207 = vmatpush.msra.mxu0 %v65
  %208 = vmatpush.msra.mxu0 %v64
  %209 = vmatmul.f32.gmra.mxu0 %v124
  %v210 = vpop.f32.mrf.mxu0
  %v211 = vadd.f32 %v191, %v210
  %212 = vdwg.mxu0
  %213 = vmatpush.msra.mxu0 %v95
  %214 = vmatpush.msra.mxu0 %v94
  %215 = vmatpush.msra.mxu0 %v93
  %216 = vmatpush.msra.mxu0 %v92
  %217 = vmatpush.msra.mxu0 %v91
  %218 = vmatpush.msra.mxu0 %v90
  %219 = vmatpush.msra.mxu0 %v89
  %220 = vmatpush.msra.mxu0 %v88
  %221 = vmatpush.msra.mxu0 %v87
  %222 = vmatpush.msra.mxu0 %v86
  %223 = vmatpush.msra.mxu0 %v85
  %224 = vmatpush.msra.mxu0 %v84
  %225 = vmatpush.msra.mxu0 %v83
  %226 = vmatpush.msra.mxu0 %v82
  %227 = vmatpush.msra.mxu0 %v81
  %228 = vmatpush.msra.mxu0 %v80
  %229 = vmatmul.f32.gmra.mxu0 %v125
  %v230 = vpop.f32.mrf.mxu0
  %v231 = vadd.f32 %v211, %v230
  %232 = vdwg.mxu0
  %233 = vmatpush.msra.mxu0 %v111
  %234 = vmatpush.msra.mxu0 %v110
  %235 = vmatpush.msra.mxu0 %v109
  %236 = vmatpush.msra.mxu0 %v108
  %237 = vmatpush.msra.mxu0 %v107
  %238 = vmatpush.msra.mxu0 %v106
  %239 = vmatpush.msra.mxu0 %v105
  %240 = vmatpush.msra.mxu0 %v104
  %241 = vmatpush.msra.mxu0 %v103
  %242 = vmatpush.msra.mxu0 %v102
  %243 = vmatpush.msra.mxu0 %v101
  %244 = vmatpush.msra.mxu0 %v100
  %245 = vmatpush.msra.mxu0 %v99
  %246 = vmatpush.msra.mxu0 %v98
  %247 = vmatpush.msra.mxu0 %v97
  %248 = vmatpush.msra.mxu0 %v96
  %249 = vmatmul.f32.gmra.mxu0 %v126
  %v250 = vpop.f32.mrf.mxu0
  %v251 = vadd.f32 %v231, %v250
  %252 = vdwg.mxu0
  %vm253 = vcmask 123904
  %v254 = vsel %vm253, %v251, -inf
  %255 = vmax.xlane.f32.xlu0 %v254
  %v256 = vpop.xlane.xlu0 %255
  %v257 = vsub.f32 %v251, %v256
  %v258 = vmul.f32 %v257, 1.442695
  %v259 = vpow.pop %v258
  %v260 = vsel %vm253, %v259, 0.0
  %261 = vadd.xlane.f32.xlu0 %v260
  %v262 = vpop.xlane.xlu0 %261
  %v263 = vlog2.pop %v262
  %v264 = vmul.f32 %v263, 0.6931472
  %v265 = vadd.f32 %v256, %v264
  %v266 = vmul.f32 %v265, 10.0
  %vm267 = vcmask 1024
  %268 = vst.msk [vmem:[%s3] sm:$0x3] %vm267, %v266
  // Predicated region
  $region14: #{model_forward.1} parent=0 // pred_check
    _
  $region15: #{model_forward.1} parent=0 // pred_check_branch
    %270 = sbr.rel (0) target = $region17
  $region16: #{model_forward.1} parent=0 // pred_region
    _
  $region17: #{model_forward.1} parent=0 // pred_fallthru
    _
  // Predicated region
  $region18: #{model_forward.1} parent=0 // pred_check
    _
  $region19: #{model_forward.1} parent=0 // pred_check_branch
    %272 = sbr.rel (0) target = $region21
  $region20: #{model_forward.1} parent=0 // pred_region
    _
  $region21: #{model_forward.1} parent=0 // pred_fallthru
    _

</llo_original>
